<compile_context>
chip_gen: v7x
topology: tpu7x:2x2x1
jax: 0.10.0
libtpu: 0.0.40
codegen_flags: <defaults>
</compile_context>

<pallas_src>
import jax
import jax.numpy as jnp
from jax.experimental import pallas as pl
from jax.experimental.pallas import tpu as pltpu


def _round_up(x, m):
    return (x + m - 1) // m * m


def _pick_batch_tile(b):
    """Whole (8-rounded) batch when small; otherwise a large tile that divides
    the padded batch so no grid step is wasted."""
    b8 = _round_up(b, 8)
    if b8 <= 512:
        return b8
    for tb in (512, 256, 128):
        if b8 % tb == 0:
            return tb
    return 128


def critic_kernel(s_ref, a_ref, w1s_ref, w1a_ref, b1_ref,
                  w2_ref, b2_ref, w3_ref, b3_ref, o_ref):
    # fc1: split into state/action halves (avoids concatenating x on the host).
    h1 = (jnp.dot(s_ref[...], w1s_ref[...], preferred_element_type=jnp.float32)
          + jnp.dot(a_ref[...], w1a_ref[...], preferred_element_type=jnp.float32)
          + b1_ref[...])
    h1 = jnp.maximum(h1, 0.0).astype(w2_ref.dtype)
    # fc2
    h2 = jnp.dot(h1, w2_ref[...], preferred_element_type=jnp.float32) + b2_ref[...]
    h2 = jnp.maximum(h2, 0.0).astype(w3_ref.dtype)
    # fc3 (no activation)
    o_ref[...] = (jnp.dot(h2, w3_ref[...], preferred_element_type=jnp.float32)
                  + b3_ref[...]).astype(o_ref.dtype)


def prepare_critic_params(params, state_dim, compute_dtype=jnp.bfloat16):
    """One-time preprocessing (NOT per training step): split fc1 into
    state/action parts, cast weights to the MXU compute dtype, keep biases in
    f32 reshaped to (1, H) for broadcasting inside the kernel."""
    w1 = jnp.asarray(params["w1"])
    return {
        "w1s": w1[:state_dim].astype(compute_dtype),
        "w1a": w1[state_dim:].astype(compute_dtype),
        "b1": jnp.asarray(params["b1"], jnp.float32).reshape(1, -1),
        "w2": jnp.asarray(params["w2"]).astype(compute_dtype),
        "b2": jnp.asarray(params["b2"], jnp.float32).reshape(1, -1),
        "w3": jnp.asarray(params["w3"]).astype(compute_dtype),
        "b3": jnp.asarray(params["b3"], jnp.float32).reshape(1, -1),
    }


@jax.jit
def critic_forward(state, action, prepared):
    """state: (B, state_dim), action: (B, action_dim) -> (B, 1) float32."""
    B, sdim = state.shape
    adim = action.shape[1]
    h1 = prepared["w2"].shape[0]
    h2 = prepared["w3"].shape[0]
    out_dim = prepared["w3"].shape[1]
    compute_dtype = prepared["w2"].dtype
    itemsize = jnp.dtype(compute_dtype).itemsize

    tb = _pick_batch_tile(B)
    b_pad = _round_up(B, tb)

    s = state.astype(compute_dtype)
    a = action.astype(compute_dtype)
    if b_pad != B:
        s = jnp.pad(s, ((0, b_pad - B), (0, 0)))
        a = jnp.pad(a, ((0, b_pad - B), (0, 0)))

    def batch_spec(cols):
        return pl.BlockSpec((tb, cols), lambda i: (i, 0))

    def resident(arr):  # full array, same block every grid step -> VMEM-resident
        return pl.BlockSpec(arr.shape, lambda i: (0, 0))

    n_weight_elems = (sdim + adim) * h1 + h1 * h2 + h2 * out_dim
    cost = pl.CostEstimate(
        flops=2 * b_pad * ((sdim + adim) * h1 + h1 * h2 + h2 * out_dim),
        transcendentals=0,
        bytes_accessed=(b_pad * (sdim + adim) * itemsize          # x in
                        + n_weight_elems * itemsize               # weights
                        + b_pad * out_dim * 4),                   # out (f32)
    )

    out_padded = pl.pallas_call(
        critic_kernel,
        out_shape=jax.ShapeDtypeStruct((b_pad, out_dim), jnp.float32),
        grid_spec=pltpu.PrefetchScalarGridSpec(
            num_scalar_prefetch=0,
            grid=(b_pad // tb,),
            in_specs=[
                batch_spec(sdim),
                batch_spec(adim),
                resident(prepared["w1s"]),
                resident(prepared["w1a"]),
                resident(prepared["b1"]),
                resident(prepared["w2"]),
                resident(prepared["b2"]),
                resident(prepared["w3"]),
                resident(prepared["b3"]),
            ],
            out_specs=batch_spec(out_dim),
        ),
        compiler_params=pltpu.CompilerParams(
            dimension_semantics=("parallel",)),
        cost_estimate=cost,
    )(s, a,
      prepared["w1s"], prepared["w1a"], prepared["b1"],
      prepared["w2"], prepared["b2"],
      prepared["w3"], prepared["b3"])

    return out_padded[:B]


def init_critic_params(key, state_dim, action_dim):
    """Deterministic PyTorch-style (uniform +/- 1/sqrt(fan_in)) init."""
    dims = [(state_dim + action_dim, 400), (400, 300), (300, 1)]
    params = {}
    for i, (fan_in, fan_out) in enumerate(dims, start=1):
        key, kw, kb = jax.random.split(key, 3)
        bound = 1.0 / jnp.sqrt(float(fan_in))
        params[f"w{i}"] = jax.random.uniform(
            kw, (fan_in, fan_out), jnp.float32, -bound, bound)
        params[f"b{i}"] = jax.random.uniform(
            kb, (fan_out,), jnp.float32, -bound, bound)
    return params


def critic_reference(state, action, params):
    x = jnp.concatenate([state, action], axis=1).astype(jnp.float32)
    x = jnp.maximum(x @ params["w1"] + params["b1"], 0.0)
    x = jnp.maximum(x @ params["w2"] + params["b2"], 0.0)
    return x @ params["w3"] + params["b3"]


if __name__ == "__main__":
    key = jax.random.PRNGKey(0)
    k_params, k_state, k_action = jax.random.split(key, 3)

    batch, state_dim, action_dim = 2, 16, 8
    params = init_critic_params(k_params, state_dim, action_dim)
    state = jax.random.normal(k_state, (batch, state_dim), jnp.float32)
    action = jax.random.normal(k_action, (batch, action_dim), jnp.float32)

    ref = critic_reference(state, action, params)

    # Exact-precision path (f32 matmuls) — tight tolerance vs reference.
    prep_f32 = prepare_critic_params(params, state_dim, compute_dtype=jnp.float32)
    out_f32 = jax.block_until_ready(critic_forward(state, action, prep_f32))
    assert out_f32.shape == (batch, 1), out_f32.shape
    assert jnp.allclose(out_f32, ref, atol=1e-4, rtol=1e-4), (out_f32, ref)

    # Fast path (bf16 matmul inputs, f32 accumulation) — loose tolerance.
    prep_bf16 = prepare_critic_params(params, state_dim, compute_dtype=jnp.bfloat16)
    out_bf16 = jax.block_until_ready(critic_forward(state, action, prep_bf16))
    assert out_bf16.shape == (batch, 1), out_bf16.shape
    rel_err = jnp.max(jnp.abs(out_bf16 - ref)) / (jnp.max(jnp.abs(ref)) + 1e-6)
    assert rel_err < 5e-2, rel_err

    print("KERNEL_OK")
</pallas_src>

<mosaic_0001>
module attributes {stable_mosaic.version = 11 : i64} {
  func.func @critic_kernel(%arg0: i32, %arg1: memref<8x16xf32, #tpu.memory_space<vmem>>, %arg2: memref<8x8xf32, #tpu.memory_space<vmem>>, %arg3: memref<16x400xf32, #tpu.memory_space<vmem>>, %arg4: memref<8x400xf32, #tpu.memory_space<vmem>>, %arg5: memref<1x400xf32, #tpu.memory_space<vmem>>, %arg6: memref<400x300xf32, #tpu.memory_space<vmem>>, %arg7: memref<1x300xf32, #tpu.memory_space<vmem>>, %arg8: memref<300x1xf32, #tpu.memory_space<vmem>>, %arg9: memref<1x1xf32, #tpu.memory_space<vmem>>, %arg10: memref<8x1xf32, #tpu.memory_space<vmem>>) attributes {dimension_semantics = [#tpu.dimension_semantics<parallel>], iteration_bounds = array<i64: 1>, scalar_prefetch = 0 : i64, scratch_operands = 0 : i64, tpu.core_type = #tpu.core_type<tc>, window_params = [{transform_indices = @transform_0, window_bounds = array<i64: 8, 16>}, {transform_indices = @transform_1, window_bounds = array<i64: 8, 8>}, {pipeline_mode = #tpu.pipeline_mode<synchronous>, transform_indices = @transform_2, window_bounds = array<i64: 16, 400>}, {pipeline_mode = #tpu.pipeline_mode<synchronous>, transform_indices = @transform_3, window_bounds = array<i64: 8, 400>}, {pipeline_mode = #tpu.pipeline_mode<synchronous>, transform_indices = @transform_4, window_bounds = array<i64: 1, 400>}, {pipeline_mode = #tpu.pipeline_mode<synchronous>, transform_indices = @transform_5, window_bounds = array<i64: 400, 300>}, {pipeline_mode = #tpu.pipeline_mode<synchronous>, transform_indices = @transform_6, window_bounds = array<i64: 1, 300>}, {pipeline_mode = #tpu.pipeline_mode<synchronous>, transform_indices = @transform_7, window_bounds = array<i64: 300, 1>}, {pipeline_mode = #tpu.pipeline_mode<synchronous>, transform_indices = @transform_8, window_bounds = array<i64: 1, 1>}, {transform_indices = @transform_9, window_bounds = array<i64: 8, 1>}]} {
    %c0 = arith.constant 0 : index
    %c0_0 = arith.constant 0 : index
    %0 = vector.load %arg1[%c0, %c0_0] : memref<8x16xf32, #tpu.memory_space<vmem>>, vector<8x16xf32>
    %c0_1 = arith.constant 0 : index
    %c0_2 = arith.constant 0 : index
    %1 = vector.load %arg3[%c0_1, %c0_2] : memref<16x400xf32, #tpu.memory_space<vmem>>, vector<16x400xf32>
    %cst = arith.constant dense<0.000000e+00> : vector<8x400xf32>
    %2 = tpu.matmul %0, %1, %cst {dimension_numbers = #tpu.dot_dimension_numbers<[1], [0], [0], [1], [0, 0, 1, 1], [], []>} : vector<8x16xf32>, vector<16x400xf32>, vector<8x400xf32> -> vector<8x400xf32>
    %c0_3 = arith.constant 0 : index
    %c0_4 = arith.constant 0 : index
    %3 = vector.load %arg2[%c0_3, %c0_4] : memref<8x8xf32, #tpu.memory_space<vmem>>, vector<8x8xf32>
    %c0_5 = arith.constant 0 : index
    %c0_6 = arith.constant 0 : index
    %4 = vector.load %arg4[%c0_5, %c0_6] : memref<8x400xf32, #tpu.memory_space<vmem>>, vector<8x400xf32>
    %cst_7 = arith.constant dense<0.000000e+00> : vector<8x400xf32>
    %5 = tpu.matmul %3, %4, %cst_7 {dimension_numbers = #tpu.dot_dimension_numbers<[1], [0], [0], [1], [0, 0, 1, 1], [], []>} : vector<8x8xf32>, vector<8x400xf32>, vector<8x400xf32> -> vector<8x400xf32>
    %6 = arith.addf %2, %5 : vector<8x400xf32>
    %c0_8 = arith.constant 0 : index
    %c0_9 = arith.constant 0 : index
    %7 = vector.load %arg5[%c0_8, %c0_9] : memref<1x400xf32, #tpu.memory_space<vmem>>, vector<1x400xf32>
    %8 = vector.broadcast %7 : vector<1x400xf32> to vector<8x400xf32>
    %9 = arith.addf %6, %8 : vector<8x400xf32>
    %cst_10 = arith.constant 0.000000e+00 : f32
    %10 = vector.broadcast %cst_10 : f32 to vector<8x400xf32>
    %11 = arith.maximumf %9, %10 : vector<8x400xf32>
    %c0_11 = arith.constant 0 : index
    %c0_12 = arith.constant 0 : index
    %12 = vector.load %arg6[%c0_11, %c0_12] : memref<400x300xf32, #tpu.memory_space<vmem>>, vector<400x300xf32>
    %cst_13 = arith.constant dense<0.000000e+00> : vector<8x300xf32>
    %13 = tpu.matmul %11, %12, %cst_13 {dimension_numbers = #tpu.dot_dimension_numbers<[1], [0], [0], [1], [0, 0, 1, 1], [], []>} : vector<8x400xf32>, vector<400x300xf32>, vector<8x300xf32> -> vector<8x300xf32>
    %c0_14 = arith.constant 0 : index
    %c0_15 = arith.constant 0 : index
    %14 = vector.load %arg7[%c0_14, %c0_15] : memref<1x300xf32, #tpu.memory_space<vmem>>, vector<1x300xf32>
    %15 = vector.broadcast %14 : vector<1x300xf32> to vector<8x300xf32>
    %16 = arith.addf %13, %15 : vector<8x300xf32>
    %cst_16 = arith.constant 0.000000e+00 : f32
    %17 = vector.broadcast %cst_16 : f32 to vector<8x300xf32>
    %18 = arith.maximumf %16, %17 : vector<8x300xf32>
    %c0_17 = arith.constant 0 : index
    %c0_18 = arith.constant 0 : index
    %19 = vector.load %arg8[%c0_17, %c0_18] : memref<300x1xf32, #tpu.memory_space<vmem>>, vector<300x1xf32>
    %cst_19 = arith.constant dense<0.000000e+00> : vector<8x1xf32>
    %20 = tpu.matmul %18, %19, %cst_19 {dimension_numbers = #tpu.dot_dimension_numbers<[1], [0], [0], [1], [0, 0, 1, 1], [], []>} : vector<8x300xf32>, vector<300x1xf32>, vector<8x1xf32> -> vector<8x1xf32>
    %c0_20 = arith.constant 0 : index
    %c0_21 = arith.constant 0 : index
    %21 = vector.load %arg9[%c0_20, %c0_21] : memref<1x1xf32, #tpu.memory_space<vmem>>, vector<1x1xf32>
    %22 = vector.broadcast %21 : vector<1x1xf32> to vector<8x1xf32>
    %23 = arith.addf %20, %22 : vector<8x1xf32>
    %c0_22 = arith.constant 0 : index
    %c0_23 = arith.constant 0 : index
    %24 = vector.load %arg10[%c0_22, %c0_23] : memref<8x1xf32, #tpu.memory_space<vmem>>, vector<8x1xf32>
    tpu.vector_store %arg10[%c0_22, %c0_23], %23 {strides = array<i32>} : memref<8x1xf32, #tpu.memory_space<vmem>>, vector<8x1xf32>,
    return
  }
  func.func @transform_0(%arg0: i32) -> (i32, i32) {
    %c0_i32 = arith.constant 0 : i32
    %c0_i32_0 = arith.constant 0 : i32
    return %arg0, %c0_i32 : i32, i32
  }
  func.func @transform_1(%arg0: i32) -> (i32, i32) {
    %c0_i32 = arith.constant 0 : i32
    %c0_i32_0 = arith.constant 0 : i32
    return %arg0, %c0_i32 : i32, i32
  }
  func.func @transform_2(%arg0: i32) -> (i32, i32) {
    %c0_i32 = arith.constant 0 : i32
    %c0_i32_0 = arith.constant 0 : i32
    %c0_i32_1 = arith.constant 0 : i32
    return %c0_i32, %c0_i32_0 : i32, i32
  }
  func.func @transform_3(%arg0: i32) -> (i32, i32) {
    %c0_i32 = arith.constant 0 : i32
    %c0_i32_0 = arith.constant 0 : i32
    %c0_i32_1 = arith.constant 0 : i32
    return %c0_i32, %c0_i32_0 : i32, i32
  }
  func.func @transform_4(%arg0: i32) -> (i32, i32) {
    %c0_i32 = arith.constant 0 : i32
    %c0_i32_0 = arith.constant 0 : i32
    %c0_i32_1 = arith.constant 0 : i32
    return %c0_i32, %c0_i32_0 : i32, i32
  }
  func.func @transform_5(%arg0: i32) -> (i32, i32) {
    %c0_i32 = arith.constant 0 : i32
    %c0_i32_0 = arith.constant 0 : i32
    %c0_i32_1 = arith.constant 0 : i32
    return %c0_i32, %c0_i32_0 : i32, i32
  }
  func.func @transform_6(%arg0: i32) -> (i32, i32) {
    %c0_i32 = arith.constant 0 : i32
    %c0_i32_0 = arith.constant 0 : i32
    %c0_i32_1 = arith.constant 0 : i32
    return %c0_i32, %c0_i32_0 : i32, i32
  }
  func.func @transform_7(%arg0: i32) -> (i32, i32) {
    %c0_i32 = arith.constant 0 : i32
    %c0_i32_0 = arith.constant 0 : i32
    %c0_i32_1 = arith.constant 0 : i32
    return %c0_i32, %c0_i32_0 : i32, i32
  }
  func.func @transform_8(%arg0: i32) -> (i32, i32) {
    %c0_i32 = arith.constant 0 : i32
    %c0_i32_0 = arith.constant 0 : i32
    %c0_i32_1 = arith.constant 0 : i32
    return %c0_i32, %c0_i32_0 : i32, i32
  }
  func.func @transform_9(%arg0: i32) -> (i32, i32) {
    %c0_i32 = arith.constant 0 : i32
    %c0_i32_0 = arith.constant 0 : i32
    return %arg0, %c0_i32 : i32, i32
  }
}

</mosaic_0001>

<llo_original>
// kernel: critic_forward.1
$region0: #{critic_forward.1}
  #allocation0 [shape = 'u32[]', space=smem, size = 0x4, offset = 0x4, fixed_abs, tag = 'smem constant byte address 0x4 - core index']
  #allocation1 [shape = 'u32[144,128]{1,0:T(1,128)}', space=vmem, size = 0x12000, scoped, tag = 'internal scratch']
  #allocation2 [shape = 'f32[1,1]{1,0:T(1,128)S(1)}', space=vmem, size = 0x200, scoped, tag = 'scoped memory for critic_forward.1']
  %s0 = inlined_call_operand.vmem [shape: f32[8,16], index: 0, kind: input, shape index: {}]
  %s1 = inlined_call_operand.vmem [shape: f32[8,8], index: 1, kind: input, shape index: {}]
  %s2 = inlined_call_operand.vmem [shape: f32[16,400], index: 2, kind: input, shape index: {}]
  %s3 = inlined_call_operand.vmem [shape: f32[8,400], index: 3, kind: input, shape index: {}]
  %s4 = inlined_call_operand.vmem [shape: f32[1,400], index: 4, kind: input, shape index: {}]
  %s5 = inlined_call_operand.hbm [shape: f32[400,300], index: 5, kind: input, shape index: {}]
  %s6 = inlined_call_operand.vmem [shape: f32[1,300], index: 6, kind: input, shape index: {}]
  %s7 = inlined_call_operand.vmem [shape: f32[300,1], index: 7, kind: input, shape index: {}]
  %s8 = inlined_call_operand.<no memory space> [shape: f32[1,1], index: 8, kind: input, shape index: {}]
  %s9 = inlined_call_operand.vmem [shape: f32[8,1], index: 9, kind: output, shape index: {}]
  %s10 = sld [smem:[#allocation0]]
  $region50: #{critic_forward.1} parent=0
    _
  %s12 = ssub.s32 1, %s10
  %s13 = scalar_select 0, %s12, %s10
  %v14 = vstv %s8
  %15 = vst [vmem:[#allocation2] sm:$0x1] %v14
  $region1: #{critic_forward.1} parent=0
    #allocation3 [shape = 'u8[614400]{0}', space=vmem, size = 0x96000, scoped, tag = 'input window, operand 5, single buffered']
    #allocation4 [shape = 's32[1]{0}', space=sflag, size = 0x4, scoped, tag = 'scoped memory for critic_forward.1']
    %16 = vsyncpa [#allocation4], 0
    // Predicated region
    $region2: #{critic_forward.1} parent=1 // pred_check
      _
    $region3: #{critic_forward.1} parent=1 // pred_check_branch
      %18 = sbr.rel (0) target = $region5
    $region4: #{critic_forward.1} parent=1 // pred_region
      _
    $region5: #{critic_forward.1} parent=1 // pred_fallthru
      _
    // Predicated region
    $region6: #{critic_forward.1} parent=1 // pred_check
      _
    $region7: #{critic_forward.1} parent=1 // pred_check_branch
      %20 = sbr.rel (0) target = $region9
    $region8: #{critic_forward.1} parent=1 // pred_region
      _
    $region9: #{critic_forward.1} parent=1 // pred_fallthru
      _
    // Predicated region
    $region10: #{critic_forward.1} parent=1 // pred_check
      _
    $region11: #{critic_forward.1} parent=1 // pred_check_branch
      %22 = sbr.rel (0) target = $region13
    $region12: #{critic_forward.1} parent=1 // pred_region
      _
    $region13: #{critic_forward.1} parent=1 // pred_fallthru
      _
    // Predicated region
    $region14: #{critic_forward.1} parent=1 // pred_check
      _
    $region15: #{critic_forward.1} parent=1 // pred_check_branch
      %24 = sbr.rel (0) target = $region17
    $region16: #{critic_forward.1} parent=1 // pred_region
      _
    $region17: #{critic_forward.1} parent=1 // pred_fallthru
      _
    // Predicated region
    $region18: #{critic_forward.1} parent=1 // pred_check
      _
    $region19: #{critic_forward.1} parent=1 // pred_check_branch
      %26 = sbr.rel (0) target = $region21
    $region20: #{critic_forward.1} parent=1 // pred_region
      _
    $region21: #{critic_forward.1} parent=1 // pred_fallthru
      _
    // Predicated region
    $region22: #{critic_forward.1} parent=1 // pred_check
      _
    $region23: #{critic_forward.1} parent=1 // pred_check_branch
      %28 = sbr.rel (0) target = $region25
    $region24: #{critic_forward.1} parent=1 // pred_region
      %s30 = ssub.s32 19200, 19200
      %31 = vsyncadd [#allocation4], %s30
      %s32 = sshll.u32 [#allocation3], 4
      %s33 = int_to_ptr.vmem [resolvable:$true] %s32
      %38 = dma.hbm_to_vmem [thread:$0]  %s5, 19200, %s33, [#allocation4], 384, 384, 24
    $region25: #{critic_forward.1} parent=1 // pred_fallthru
      _
    // Predicated region
    $region26: #{critic_forward.1} parent=1 // pred_check
      _
    $region27: #{critic_forward.1} parent=1 // pred_check_branch
      %40 = sbr.rel (0) target = $region29
    $region28: #{critic_forward.1} parent=1 // pred_region
      _
    $region29: #{critic_forward.1} parent=1 // pred_fallthru
      _
    // Predicated region
    $region30: #{critic_forward.1} parent=1 // pred_check
      _
    $region31: #{critic_forward.1} parent=1 // pred_check_branch
      %42 = sbr.rel (0) target = $region33
    $region32: #{critic_forward.1} parent=1 // pred_region
      _
    $region33: #{critic_forward.1} parent=1 // pred_fallthru
      _
    // Predicated region
    $region34: #{critic_forward.1} parent=1 // pred_check
      _
    $region35: #{critic_forward.1} parent=1 // pred_check_branch
      %44 = sbr.rel (0) target = $region37
    $region36: #{critic_forward.1} parent=1 // pred_region
      _
    $region37: #{critic_forward.1} parent=1 // pred_fallthru
      _
    // Predicated region
    $region38: #{critic_forward.1} parent=1 // pred_check
      _
    $region39: #{critic_forward.1} parent=1 // pred_check_branch
      %46 = sbr.rel (0) target = $region41
    $region40: #{critic_forward.1} parent=1 // pred_region
      %47 = dma.done [#allocation4], 19200
    $region41: #{critic_forward.1} parent=1 // pred_fallthru
      _
    %v48 = vld [vmem:[%s0] sm:$0xff]
    %v49 = vld [vmem:[%s2] sm:$0xff]
    %v50 = vld [vmem:[%s2 + $0x8] sm:$0xff]
    %v51 = vld [vmem:[%s2 + $0x10] sm:$0xff]
    %v52 = vld [vmem:[%s2 + $0x18] sm:$0xff]
    %v53 = vld [vmem:[%s2 + $0x20] sm:$0xff]
    %v54 = vld [vmem:[%s2 + $0x28] sm:$0xff]
    %v55 = vld [vmem:[%s2 + $0x30] sm:$0xff]
    %v56 = vld [vmem:[%s2 + $0x38] sm:$0xff]
    %v57 = vld [vmem:[%s1] sm:$0xff]
    %v58 = vld [vmem:[%s3] sm:$0xff]
    %v59 = vld [vmem:[%s3 + $0x8] sm:$0xff]
    %v60 = vld [vmem:[%s3 + $0x10] sm:$0xff]
    %v61 = vld [vmem:[%s3 + $0x18] sm:$0xff]
    %vm62 = vcmask 64512
    %v64 = vsel %vm62, %v57, 0
    %66 = vmatprep.subr.mxu0 %v59
    %67 = vmatpush1.msra.mxu0 %v58
    %68 = vmatprep.subr.mxu0 0.0
    %69 = vmatpush1.msra.mxu0 0.0
    %70 = vmatprep.subr.mxu0 0.0
    %71 = vmatpush1.msra.mxu0 0.0
    %72 = vmatprep.subr.mxu0 0.0
    %73 = vmatpush1.msra.mxu0 0.0
    %74 = vmatprep.subr.mxu0 0.0
    %75 = vmatpush1.msra.mxu0 0.0
    %76 = vmatprep.subr.mxu0 0.0
    %77 = vmatpush1.msra.mxu0 0.0
    %78 = vmatprep.subr.mxu0 0.0
    %79 = vmatpush1.msra.mxu0 0.0
    %80 = vmatprep.subr.mxu0 0.0
    %81 = vmatpush1.msra.mxu0 0.0
    %82 = vmatprep.subr.mxu0 0.0
    %83 = vmatpush1.msra.mxu0 0.0
    %84 = vmatprep.subr.mxu0 0.0
    %85 = vmatpush1.msra.mxu0 0.0
    %86 = vmatprep.subr.mxu0 0.0
    %87 = vmatpush1.msra.mxu0 0.0
    %88 = vmatprep.subr.mxu0 0.0
    %89 = vmatpush1.msra.mxu0 0.0
    %90 = vmatprep.subr.mxu0 0.0
    %91 = vmatpush1.msra.mxu0 0.0
    %92 = vmatprep.subr.mxu0 0.0
    %93 = vmatpush1.msra.mxu0 0.0
    %94 = vmatprep.subr.mxu0 0.0
    %95 = vmatpush1.msra.mxu0 0.0
    %96 = vmatprep.subr.mxu0 0.0
    %97 = vmatpush1.msra.mxu0 0.0
    %98 = vmatprep.subr.mxu0 0.0
    %99 = vmatpush1.msra.mxu0 0.0
    %100 = vmatprep.subr.mxu0 0.0
    %101 = vmatpush1.msra.mxu0 0.0
    %102 = vmatprep.subr.mxu0 0.0
    %103 = vmatpush1.msra.mxu0 0.0
    %104 = vmatprep.subr.mxu0 0.0
    %105 = vmatpush1.msra.mxu0 0.0
    %106 = vmatprep.subr.mxu0 0.0
    %107 = vmatpush1.msra.mxu0 0.0
    %108 = vmatprep.subr.mxu0 0.0
    %109 = vmatpush1.msra.mxu0 0.0
    %110 = vmatprep.subr.mxu0 0.0
    %111 = vmatpush1.msra.mxu0 0.0
    %112 = vmatprep.subr.mxu0 0.0
    %113 = vmatpush1.msra.mxu0 0.0
    %114 = vmatprep.subr.mxu0 0.0
    %115 = vmatpush1.msra.mxu0 0.0
    %116 = vmatprep.subr.mxu0 0.0
    %117 = vmatpush1.msra.mxu0 0.0
    %118 = vmatprep.subr.mxu0 0.0
    %119 = vmatpush1.msra.mxu0 0.0
    %120 = vmatprep.subr.mxu0 0.0
    %121 = vmatpush1.msra.mxu0 0.0
    %122 = vmatprep.subr.mxu0 0.0
    %123 = vmatpush1.msra.mxu0 0.0
    %124 = vmatprep.subr.mxu0 0.0
    %125 = vmatpush1.msra.mxu0 0.0
    %126 = vmatprep.subr.mxu0 0.0
    %127 = vmatpush1.msra.mxu0 0.0
    %128 = vmatprep.subr.mxu0 0.0
    %129 = vmatpush1.msra.mxu0 0.0
    %130 = vmatprep.mubr.f32.mxu0 0.0
    %131 = vmatmul.mubr.f32.gmra.mrb[0].mxu0 %v64
    %v132 = vpop.f32.mrb[0].mxu0
    %v133 = vadd.f32 0.0, %v132
    %v134 = vpop.f32.mrb[0].mxu0
    %v135 = vadd.f32 0.0, %v134
    %136 = vdwg.mxu0
    %137 = vmatprep.subr.mxu0 %v61
    %138 = vmatpush1.msra.mxu0 %v60
    %139 = vmatprep.subr.mxu0 0.0
    %140 = vmatpush1.msra.mxu0 0.0
    %141 = vmatprep.subr.mxu0 0.0
    %142 = vmatpush1.msra.mxu0 0.0
    %143 = vmatprep.subr.mxu0 0.0
    %144 = vmatpush1.msra.mxu0 0.0
    %145 = vmatprep.subr.mxu0 0.0
    %146 = vmatpush1.msra.mxu0 0.0
    %147 = vmatprep.subr.mxu0 0.0
    %148 = vmatpush1.msra.mxu0 0.0
    %149 = vmatprep.subr.mxu0 0.0
    %150 = vmatpush1.msra.mxu0 0.0
    %151 = vmatprep.subr.mxu0 0.0
    %152 = vmatpush1.msra.mxu0 0.0
    %153 = vmatprep.subr.mxu0 0.0
    %154 = vmatpush1.msra.mxu0 0.0
    %155 = vmatprep.subr.mxu0 0.0
    %156 = vmatpush1.msra.mxu0 0.0
    %157 = vmatprep.subr.mxu0 0.0
    %158 = vmatpush1.msra.mxu0 0.0
    %159 = vmatprep.subr.mxu0 0.0
    %160 = vmatpush1.msra.mxu0 0.0
    %161 = vmatprep.subr.mxu0 0.0
    %162 = vmatpush1.msra.mxu0 0.0
    %163 = vmatprep.subr.mxu0 0.0
    %164 = vmatpush1.msra.mxu0 0.0
    %165 = vmatprep.subr.mxu0 0.0
    %166 = vmatpush1.msra.mxu0 0.0
    %167 = vmatprep.subr.mxu0 0.0
    %168 = vmatpush1.msra.mxu0 0.0
    %169 = vmatprep.subr.mxu0 0.0
    %170 = vmatpush1.msra.mxu0 0.0
    %171 = vmatprep.subr.mxu0 0.0
    %172 = vmatpush1.msra.mxu0 0.0
    %173 = vmatprep.subr.mxu0 0.0
    %174 = vmatpush1.msra.mxu0 0.0
    %175 = vmatprep.subr.mxu0 0.0
    %176 = vmatpush1.msra.mxu0 0.0
    %177 = vmatprep.subr.mxu0 0.0
    %178 = vmatpush1.msra.mxu0 0.0
    %179 = vmatprep.subr.mxu0 0.0
    %180 = vmatpush1.msra.mxu0 0.0
    %181 = vmatprep.subr.mxu0 0.0
    %182 = vmatpush1.msra.mxu0 0.0
    %183 = vmatprep.subr.mxu0 0.0
    %184 = vmatpush1.msra.mxu0 0.0
    %185 = vmatprep.subr.mxu0 0.0
    %186 = vmatpush1.msra.mxu0 0.0
    %187 = vmatprep.subr.mxu0 0.0
    %188 = vmatpush1.msra.mxu0 0.0
    %189 = vmatprep.subr.mxu0 0.0
    %190 = vmatpush1.msra.mxu0 0.0
    %191 = vmatprep.subr.mxu0 0.0
    %192 = vmatpush1.msra.mxu0 0.0
    %193 = vmatprep.subr.mxu0 0.0
    %194 = vmatpush1.msra.mxu0 0.0
    %195 = vmatprep.subr.mxu0 0.0
    %196 = vmatpush1.msra.mxu0 0.0
    %197 = vmatprep.subr.mxu0 0.0
    %198 = vmatpush1.msra.mxu0 0.0
    %199 = vmatprep.subr.mxu0 0.0
    %200 = vmatpush1.msra.mxu0 0.0
    %201 = vmatprep.mubr.f32.mxu0 0.0
    %202 = vmatmul.mubr.f32.gmra.mrb[0].mxu0 %v64
    %v203 = vpop.f32.mrb[0].mxu0
    %v204 = vadd.f32 0.0, %v203
    %v205 = vpop.f32.mrb[0].mxu0
    %v206 = vadd.f32 0.0, %v205
    %207 = vdwg.mxu0
    %vm208 = vcmask 130048
    %v210 = vsel %vm208, %v48, 0
    %212 = vmatprep.subr.mxu0 %v50
    %213 = vmatpush1.msra.mxu0 %v49
    %214 = vmatprep.subr.mxu0 %v54
    %215 = vmatpush1.msra.mxu0 %v53
    %216 = vmatprep.subr.mxu0 0.0
    %217 = vmatpush1.msra.mxu0 0.0
    %218 = vmatprep.subr.mxu0 0.0
    %219 = vmatpush1.msra.mxu0 0.0
    %220 = vmatprep.subr.mxu0 0.0
    %221 = vmatpush1.msra.mxu0 0.0
    %222 = vmatprep.subr.mxu0 0.0
    %223 = vmatpush1.msra.mxu0 0.0
    %224 = vmatprep.subr.mxu0 0.0
    %225 = vmatpush1.msra.mxu0 0.0
    %226 = vmatprep.subr.mxu0 0.0
    %227 = vmatpush1.msra.mxu0 0.0
    %228 = vmatprep.subr.mxu0 0.0
    %229 = vmatpush1.msra.mxu0 0.0
    %230 = vmatprep.subr.mxu0 0.0
    %231 = vmatpush1.msra.mxu0 0.0
    %232 = vmatprep.subr.mxu0 0.0
    %233 = vmatpush1.msra.mxu0 0.0
    %234 = vmatprep.subr.mxu0 0.0
    %235 = vmatpush1.msra.mxu0 0.0
    %236 = vmatprep.subr.mxu0 0.0
    %237 = vmatpush1.msra.mxu0 0.0
    %238 = vmatprep.subr.mxu0 0.0
    %239 = vmatpush1.msra.mxu0 0.0
    %240 = vmatprep.subr.mxu0 0.0
    %241 = vmatpush1.msra.mxu0 0.0
    %242 = vmatprep.subr.mxu0 0.0
    %243 = vmatpush1.msra.mxu0 0.0
    %244 = vmatprep.subr.mxu0 0.0
    %245 = vmatpush1.msra.mxu0 0.0
    %246 = vmatprep.subr.mxu0 0.0
    %247 = vmatpush1.msra.mxu0 0.0
    %248 = vmatprep.subr.mxu0 0.0
    %249 = vmatpush1.msra.mxu0 0.0
    %250 = vmatprep.subr.mxu0 0.0
    %251 = vmatpush1.msra.mxu0 0.0
    %252 = vmatprep.subr.mxu0 0.0
    %253 = vmatpush1.msra.mxu0 0.0
    %254 = vmatprep.subr.mxu0 0.0
    %255 = vmatpush1.msra.mxu0 0.0
    %256 = vmatprep.subr.mxu0 0.0
    %257 = vmatpush1.msra.mxu0 0.0
    %258 = vmatprep.subr.mxu0 0.0
    %259 = vmatpush1.msra.mxu0 0.0
    %260 = vmatprep.subr.mxu0 0.0
    %261 = vmatpush1.msra.mxu0 0.0
    %262 = vmatprep.subr.mxu0 0.0
    %263 = vmatpush1.msra.mxu0 0.0
    %264 = vmatprep.subr.mxu0 0.0
    %265 = vmatpush1.msra.mxu0 0.0
    %266 = vmatprep.subr.mxu0 0.0
    %267 = vmatpush1.msra.mxu0 0.0
    %268 = vmatprep.subr.mxu0 0.0
    %269 = vmatpush1.msra.mxu0 0.0
    %270 = vmatprep.subr.mxu0 0.0
    %271 = vmatpush1.msra.mxu0 0.0
    %272 = vmatprep.subr.mxu0 0.0
    %273 = vmatpush1.msra.mxu0 0.0
    %274 = vmatprep.subr.mxu0 0.0
    %275 = vmatpush1.msra.mxu0 0.0
    %276 = vmatprep.mubr.f32.mxu0 0.0
    %277 = vmatmul.mubr.f32.gmra.mrb[0].mxu0 %v210
    %v278 = vpop.f32.mrb[0].mxu0
    %v279 = vadd.f32 %v133, %v278
    %v280 = vpop.f32.mrb[0].mxu0
    %v281 = vadd.f32 %v135, %v280
    %282 = vdwg.mxu0
    %283 = vmatprep.subr.mxu0 %v52
    %284 = vmatpush1.msra.mxu0 %v51
    %285 = vmatprep.subr.mxu0 %v56
    %286 = vmatpush1.msra.mxu0 %v55
    %287 = vmatprep.subr.mxu0 0.0
    %288 = vmatpush1.msra.mxu0 0.0
    %289 = vmatprep.subr.mxu0 0.0
    %290 = vmatpush1.msra.mxu0 0.0
    %291 = vmatprep.subr.mxu0 0.0
    %292 = vmatpush1.msra.mxu0 0.0
    %293 = vmatprep.subr.mxu0 0.0
    %294 = vmatpush1.msra.mxu0 0.0
    %295 = vmatprep.subr.mxu0 0.0
    %296 = vmatpush1.msra.mxu0 0.0
    %297 = vmatprep.subr.mxu0 0.0
    %298 = vmatpush1.msra.mxu0 0.0
    %299 = vmatprep.subr.mxu0 0.0
    %300 = vmatpush1.msra.mxu0 0.0
    %301 = vmatprep.subr.mxu0 0.0
    %302 = vmatpush1.msra.mxu0 0.0
    %303 = vmatprep.subr.mxu0 0.0
    %304 = vmatpush1.msra.mxu0 0.0
    %305 = vmatprep.subr.mxu0 0.0
    %306 = vmatpush1.msra.mxu0 0.0
    %307 = vmatprep.subr.mxu0 0.0
    %308 = vmatpush1.msra.mxu0 0.0
    %309 = vmatprep.subr.mxu0 0.0
    %310 = vmatpush1.msra.mxu0 0.0
    %311 = vmatprep.subr.mxu0 0.0
    %312 = vmatpush1.msra.mxu0 0.0
    %313 = vmatprep.subr.mxu0 0.0
    %314 = vmatpush1.msra.mxu0 0.0
    %315 = vmatprep.subr.mxu0 0.0
    %316 = vmatpush1.msra.mxu0 0.0
    %317 = vmatprep.subr.mxu0 0.0
    %318 = vmatpush1.msra.mxu0 0.0
    %319 = vmatprep.subr.mxu0 0.0
    %320 = vmatpush1.msra.mxu0 0.0
    %321 = vmatprep.subr.mxu0 0.0
    %322 = vmatpush1.msra.mxu0 0.0
    %323 = vmatprep.subr.mxu0 0.0
    %324 = vmatpush1.msra.mxu0 0.0
    %325 = vmatprep.subr.mxu0 0.0
    %326 = vmatpush1.msra.mxu0 0.0
    %327 = vmatprep.subr.mxu0 0.0
    %328 = vmatpush1.msra.mxu0 0.0
    %329 = vmatprep.subr.mxu0 0.0
    %330 = vmatpush1.msra.mxu0 0.0
    %331 = vmatprep.subr.mxu0 0.0
    %332 = vmatpush1.msra.mxu0 0.0
    %333 = vmatprep.subr.mxu0 0.0
    %334 = vmatpush1.msra.mxu0 0.0
    %335 = vmatprep.subr.mxu0 0.0
    %336 = vmatpush1.msra.mxu0 0.0
    %337 = vmatprep.subr.mxu0 0.0
    %338 = vmatpush1.msra.mxu0 0.0
    %339 = vmatprep.subr.mxu0 0.0
    %340 = vmatpush1.msra.mxu0 0.0
    %341 = vmatprep.subr.mxu0 0.0
    %342 = vmatpush1.msra.mxu0 0.0
    %343 = vmatprep.subr.mxu0 0.0
    %344 = vmatpush1.msra.mxu0 0.0
    %345 = vmatprep.subr.mxu0 0.0
    %346 = vmatpush1.msra.mxu0 0.0
    %347 = vmatprep.mubr.f32.mxu0 0.0
    %348 = vmatmul.mubr.f32.gmra.mrb[0].mxu0 %v210
    %v349 = vpop.f32.mrb[0].mxu0
    %v350 = vadd.f32 %v204, %v349
    %v351 = vpop.f32.mrb[0].mxu0
    %v352 = vadd.f32 %v206, %v351
    %353 = vdwg.mxu0
    %v354 = vld [vmem:[%s4] sm:$0xf]
    %v356 = vlaneseq
    %v357 = vshrl.u32 %v356, 7
    %v358 = vsub.s32 0, %v357
    %v359 = vrot.slane %v354, %v358
    %v360 = vlaneseq
    %v361 = vshrl.u32 %v360, 7
    %v362 = vsub.s32 1, %v361
    %v363 = vrot.slane %v354, %v362
    %v364 = vlaneseq
    %v365 = vshrl.u32 %v364, 7
    %v366 = vsub.s32 2, %v365
    %v367 = vrot.slane %v354, %v366
    %v368 = vlaneseq
    %v369 = vshrl.u32 %v368, 7
    %v370 = vsub.s32 3, %v369
    %v371 = vrot.slane %v354, %v370
    %v376 = vadd.f32 %v279, %v359
    %v377 = vadd.f32 %v281, %v363
    %v378 = vadd.f32 %v350, %v367
    %v379 = vadd.f32 %v352, %v371
    %v380 = vmax.f32 %v376, 0.0
    %v381 = vmax.f32 %v377, 0.0
    %v382 = vmax.f32 %v378, 0.0
    %v383 = vmax.f32 %v379, 0.0
    %v384 = vld [vmem:[#allocation3] sm:$0xff]
    %v385 = vld [vmem:[#allocation3 + $0x8] sm:$0xff]
    %v386 = vld [vmem:[#allocation3 + $0x10] sm:$0xff]
    %v387 = vld [vmem:[#allocation3 + $0x18] sm:$0xff]
    %v388 = vld [vmem:[#allocation3 + $0x20] sm:$0xff]
    %v389 = vld [vmem:[#allocation3 + $0x28] sm:$0xff]
    %v390 = vld [vmem:[#allocation3 + $0x30] sm:$0xff]
    %v391 = vld [vmem:[#allocation3 + $0x38] sm:$0xff]
    %v392 = vld [vmem:[#allocation3 + $0x40] sm:$0xff]
    %v393 = vld [vmem:[#allocation3 + $0x48] sm:$0xff]
    %v394 = vld [vmem:[#allocation3 + $0x50] sm:$0xff]
    %v395 = vld [vmem:[#allocation3 + $0x58] sm:$0xff]
    %v396 = vld [vmem:[#allocation3 + $0x60] sm:$0xff]
    %v397 = vld [vmem:[#allocation3 + $0x68] sm:$0xff]
    %v398 = vld [vmem:[#allocation3 + $0x70] sm:$0xff]
    %v399 = vld [vmem:[#allocation3 + $0x78] sm:$0xff]
    %v400 = vld [vmem:[#allocation3 + $0x80] sm:$0xff]
    %v401 = vld [vmem:[#allocation3 + $0x88] sm:$0xff]
    %v402 = vld [vmem:[#allocation3 + $0x90] sm:$0xff]
    %v403 = vld [vmem:[#allocation3 + $0x98] sm:$0xff]
    %v404 = vld [vmem:[#allocation3 + $0xa0] sm:$0xff]
    %v405 = vld [vmem:[#allocation3 + $0xa8] sm:$0xff]
    %v406 = vld [vmem:[#allocation3 + $0xb0] sm:$0xff]
    %v407 = vld [vmem:[#allocation3 + $0xb8] sm:$0xff]
    %v408 = vld [vmem:[#allocation3 + $0xc0] sm:$0xff]
    %v409 = vld [vmem:[#allocation3 + $0xc8] sm:$0xff]
    %v410 = vld [vmem:[#allocation3 + $0xd0] sm:$0xff]
    %v411 = vld [vmem:[#allocation3 + $0xd8] sm:$0xff]
    %v412 = vld [vmem:[#allocation3 + $0xe0] sm:$0xff]
    %v413 = vld [vmem:[#allocation3 + $0xe8] sm:$0xff]
    %v414 = vld [vmem:[#allocation3 + $0xf0] sm:$0xff]
    %v415 = vld [vmem:[#allocation3 + $0xf8] sm:$0xff]
    %v416 = vld [vmem:[#allocation3 + $0x100] sm:$0xff]
    %v417 = vld [vmem:[#allocation3 + $0x108] sm:$0xff]
    %v418 = vld [vmem:[#allocation3 + $0x110] sm:$0xff]
    %v419 = vld [vmem:[#allocation3 + $0x118] sm:$0xff]
    %v420 = vld [vmem:[#allocation3 + $0x120] sm:$0xff]
    %v421 = vld [vmem:[#allocation3 + $0x128] sm:$0xff]
    %v422 = vld [vmem:[#allocation3 + $0x130] sm:$0xff]
    %v423 = vld [vmem:[#allocation3 + $0x138] sm:$0xff]
    %v424 = vld [vmem:[#allocation3 + $0x140] sm:$0xff]
    %v425 = vld [vmem:[#allocation3 + $0x148] sm:$0xff]
    %v426 = vld [vmem:[#allocation3 + $0x150] sm:$0xff]
    %v427 = vld [vmem:[#allocation3 + $0x158] sm:$0xff]
    %v428 = vld [vmem:[#allocation3 + $0x160] sm:$0xff]
    %v429 = vld [vmem:[#allocation3 + $0x168] sm:$0xff]
    %v430 = vld [vmem:[#allocation3 + $0x170] sm:$0xff]
    %v431 = vld [vmem:[#allocation3 + $0x178] sm:$0xff]
    %v432 = vld [vmem:[#allocation3 + $0x180] sm:$0xff]
    %v433 = vld [vmem:[#allocation3 + $0x188] sm:$0xff]
    %v434 = vld [vmem:[#allocation3 + $0x190] sm:$0xff]
    %v435 = vld [vmem:[#allocation3 + $0x198] sm:$0xff]
    %v436 = vld [vmem:[#allocation3 + $0x1a0] sm:$0xff]
    %v437 = vld [vmem:[#allocation3 + $0x1a8] sm:$0xff]
    %v438 = vld [vmem:[#allocation3 + $0x1b0] sm:$0xff]
    %v439 = vld [vmem:[#allocation3 + $0x1b8] sm:$0xff]
    %v440 = vld [vmem:[#allocation3 + $0x1c0] sm:$0xff]
    %v441 = vld [vmem:[#allocation3 + $0x1c8] sm:$0xff]
    %v442 = vld [vmem:[#allocation3 + $0x1d0] sm:$0xff]
    %v443 = vld [vmem:[#allocation3 + $0x1d8] sm:$0xff]
    %v444 = vld [vmem:[#allocation3 + $0x1e0] sm:$0xff]
    %v445 = vld [vmem:[#allocation3 + $0x1e8] sm:$0xff]
    %v446 = vld [vmem:[#allocation3 + $0x1f0] sm:$0xff]
    %v447 = vld [vmem:[#allocation3 + $0x1f8] sm:$0xff]
    %v448 = vld [vmem:[#allocation3 + $0x200] sm:$0xff]
    %v449 = vld [vmem:[#allocation3 + $0x208] sm:$0xff]
    %v450 = vld [vmem:[#allocation3 + $0x210] sm:$0xff]
    %v451 = vld [vmem:[#allocation3 + $0x218] sm:$0xff]
    %v452 = vld [vmem:[#allocation3 + $0x220] sm:$0xff]
    %v453 = vld [vmem:[#allocation3 + $0x228] sm:$0xff]
    %v454 = vld [vmem:[#allocation3 + $0x230] sm:$0xff]
    %v455 = vld [vmem:[#allocation3 + $0x238] sm:$0xff]
    %v456 = vld [vmem:[#allocation3 + $0x240] sm:$0xff]
    %v457 = vld [vmem:[#allocation3 + $0x248] sm:$0xff]
    %v458 = vld [vmem:[#allocation3 + $0x250] sm:$0xff]
    %v459 = vld [vmem:[#allocation3 + $0x258] sm:$0xff]
    %v460 = vld [vmem:[#allocation3 + $0x260] sm:$0xff]
    %v461 = vld [vmem:[#allocation3 + $0x268] sm:$0xff]
    %v462 = vld [vmem:[#allocation3 + $0x270] sm:$0xff]
    %v463 = vld [vmem:[#allocation3 + $0x278] sm:$0xff]
    %v464 = vld [vmem:[#allocation3 + $0x280] sm:$0xff]
    %v465 = vld [vmem:[#allocation3 + $0x288] sm:$0xff]
    %v466 = vld [vmem:[#allocation3 + $0x290] sm:$0xff]
    %v467 = vld [vmem:[#allocation3 + $0x298] sm:$0xff]
    %v468 = vld [vmem:[#allocation3 + $0x2a0] sm:$0xff]
    %v469 = vld [vmem:[#allocation3 + $0x2a8] sm:$0xff]
    %v470 = vld [vmem:[#allocation3 + $0x2b0] sm:$0xff]
    %v471 = vld [vmem:[#allocation3 + $0x2b8] sm:$0xff]
    %v472 = vld [vmem:[#allocation3 + $0x2c0] sm:$0xff]
    %v473 = vld [vmem:[#allocation3 + $0x2c8] sm:$0xff]
    %v474 = vld [vmem:[#allocation3 + $0x2d0] sm:$0xff]
    %v475 = vld [vmem:[#allocation3 + $0x2d8] sm:$0xff]
    %v476 = vld [vmem:[#allocation3 + $0x2e0] sm:$0xff]
    %v477 = vld [vmem:[#allocation3 + $0x2e8] sm:$0xff]
    %v478 = vld [vmem:[#allocation3 + $0x2f0] sm:$0xff]
    %v479 = vld [vmem:[#allocation3 + $0x2f8] sm:$0xff]
    %v480 = vld [vmem:[#allocation3 + $0x300] sm:$0xff]
    %v481 = vld [vmem:[#allocation3 + $0x308] sm:$0xff]
    %v482 = vld [vmem:[#allocation3 + $0x310] sm:$0xff]
    %v483 = vld [vmem:[#allocation3 + $0x318] sm:$0xff]
    %v484 = vld [vmem:[#allocation3 + $0x320] sm:$0xff]
    %v485 = vld [vmem:[#allocation3 + $0x328] sm:$0xff]
    %v486 = vld [vmem:[#allocation3 + $0x330] sm:$0xff]
    %v487 = vld [vmem:[#allocation3 + $0x338] sm:$0xff]
    %v488 = vld [vmem:[#allocation3 + $0x340] sm:$0xff]
    %v489 = vld [vmem:[#allocation3 + $0x348] sm:$0xff]
    %v490 = vld [vmem:[#allocation3 + $0x350] sm:$0xff]
    %v491 = vld [vmem:[#allocation3 + $0x358] sm:$0xff]
    %v492 = vld [vmem:[#allocation3 + $0x360] sm:$0xff]
    %v493 = vld [vmem:[#allocation3 + $0x368] sm:$0xff]
    %v494 = vld [vmem:[#allocation3 + $0x370] sm:$0xff]
    %v495 = vld [vmem:[#allocation3 + $0x378] sm:$0xff]
    %v496 = vld [vmem:[#allocation3 + $0x380] sm:$0xff]
    %v497 = vld [vmem:[#allocation3 + $0x388] sm:$0xff]
    %v498 = vld [vmem:[#allocation3 + $0x390] sm:$0xff]
    %v499 = vld [vmem:[#allocation3 + $0x398] sm:$0xff]
    %v500 = vld [vmem:[#allocation3 + $0x3a0] sm:$0xff]
    %v501 = vld [vmem:[#allocation3 + $0x3a8] sm:$0xff]
    %v502 = vld [vmem:[#allocation3 + $0x3b0] sm:$0xff]
    %v503 = vld [vmem:[#allocation3 + $0x3b8] sm:$0xff]
    %v504 = vld [vmem:[#allocation3 + $0x3c0] sm:$0xff]
    %v505 = vld [vmem:[#allocation3 + $0x3c8] sm:$0xff]
    %v506 = vld [vmem:[#allocation3 + $0x3d0] sm:$0xff]
    %v507 = vld [vmem:[#allocation3 + $0x3d8] sm:$0xff]
    %v508 = vld [vmem:[#allocation3 + $0x3e0] sm:$0xff]
    %v509 = vld [vmem:[#allocation3 + $0x3e8] sm:$0xff]
    %v510 = vld [vmem:[#allocation3 + $0x3f0] sm:$0xff]
    %v511 = vld [vmem:[#allocation3 + $0x3f8] sm:$0xff]
    %v512 = vld [vmem:[#allocation3 + $0x400] sm:$0xff]
    %v513 = vld [vmem:[#allocation3 + $0x408] sm:$0xff]
    %v514 = vld [vmem:[#allocation3 + $0x410] sm:$0xff]
    %v515 = vld [vmem:[#allocation3 + $0x418] sm:$0xff]
    %v516 = vld [vmem:[#allocation3 + $0x420] sm:$0xff]
    %v517 = vld [vmem:[#allocation3 + $0x428] sm:$0xff]
    %v518 = vld [vmem:[#allocation3 + $0x430] sm:$0xff]
    %v519 = vld [vmem:[#allocation3 + $0x438] sm:$0xff]
    %v520 = vld [vmem:[#allocation3 + $0x440] sm:$0xff]
    %v521 = vld [vmem:[#allocation3 + $0x448] sm:$0xff]
    %v522 = vld [vmem:[#allocation3 + $0x450] sm:$0xff]
    %v523 = vld [vmem:[#allocation3 + $0x458] sm:$0xff]
    %v524 = vld [vmem:[#allocation3 + $0x460] sm:$0xff]
    %v525 = vld [vmem:[#allocation3 + $0x468] sm:$0xff]
    %v526 = vld [vmem:[#allocation3 + $0x470] sm:$0xff]
    %v527 = vld [vmem:[#allocation3 + $0x478] sm:$0xff]
    %v528 = vld [vmem:[#allocation3 + $0x480] sm:$0xff]
    %v529 = vld [vmem:[#allocation3 + $0x488] sm:$0xff]
    %v530 = vld [vmem:[#allocation3 + $0x490] sm:$0xff]
    %v531 = vld [vmem:[#allocation3 + $0x498] sm:$0xff]
    %v532 = vld [vmem:[#allocation3 + $0x4a0] sm:$0xff]
    %v533 = vld [vmem:[#allocation3 + $0x4a8] sm:$0xff]
    %v534 = vld [vmem:[%s6] sm:$0x7]
    %v536 = vlaneseq
    %v537 = vshrl.u32 %v536, 7
    %v538 = vsub.s32 0, %v537
    %v539 = vrot.slane %v534, %v538
    %v540 = vlaneseq
    %v541 = vshrl.u32 %v540, 7
    %v542 = vsub.s32 1, %v541
    %v543 = vrot.slane %v534, %v542
    %v544 = vlaneseq
    %v545 = vshrl.u32 %v544, 7
    %v546 = vsub.s32 2, %v545
    %v547 = vrot.slane %v534, %v546
    %v552 = vsel %vm208, %v383, 0
    %554 = vmatprep.subr.mxu0 %v385
    %555 = vmatpush1.msra.mxu0 %v384
    %556 = vmatprep.subr.mxu0 %v388
    %557 = vmatpush1.msra.mxu0 %v387
    %558 = vmatprep.subr.mxu0 %v391
    %559 = vmatpush1.msra.mxu0 %v390
    %560 = vmatprep.subr.mxu0 %v394
    %561 = vmatpush1.msra.mxu0 %v393
    %562 = vmatprep.subr.mxu0 %v397
    %563 = vmatpush1.msra.mxu0 %v396
    %564 = vmatprep.subr.mxu0 %v400
    %565 = vmatpush1.msra.mxu0 %v399
    %566 = vmatprep.subr.mxu0 %v403
    %567 = vmatpush1.msra.mxu0 %v402
    %568 = vmatprep.subr.mxu0 %v406
    %569 = vmatpush1.msra.mxu0 %v405
    %570 = vmatprep.subr.mxu0 %v409
    %571 = vmatpush1.msra.mxu0 %v408
    %572 = vmatprep.subr.mxu0 %v412
    %573 = vmatpush1.msra.mxu0 %v411
    %574 = vmatprep.subr.mxu0 %v415
    %575 = vmatpush1.msra.mxu0 %v414
    %576 = vmatprep.subr.mxu0 %v418
    %577 = vmatpush1.msra.mxu0 %v417
    %578 = vmatprep.subr.mxu0 %v421
    %579 = vmatpush1.msra.mxu0 %v420
    %580 = vmatprep.subr.mxu0 %v424
    %581 = vmatpush1.msra.mxu0 %v423
    %582 = vmatprep.subr.mxu0 %v427
    %583 = vmatpush1.msra.mxu0 %v426
    %584 = vmatprep.subr.mxu0 %v430
    %585 = vmatpush1.msra.mxu0 %v429
    %586 = vmatprep.subr.mxu0 %v433
    %587 = vmatpush1.msra.mxu0 %v432
    %588 = vmatprep.subr.mxu0 %v436
    %589 = vmatpush1.msra.mxu0 %v435
    %590 = vmatprep.subr.mxu0 %v439
    %591 = vmatpush1.msra.mxu0 %v438
    %592 = vmatprep.subr.mxu0 %v442
    %593 = vmatpush1.msra.mxu0 %v441
    %594 = vmatprep.subr.mxu0 %v445
    %595 = vmatpush1.msra.mxu0 %v444
    %596 = vmatprep.subr.mxu0 %v448
    %597 = vmatpush1.msra.mxu0 %v447
    %598 = vmatprep.subr.mxu0 %v451
    %599 = vmatpush1.msra.mxu0 %v450
    %600 = vmatprep.subr.mxu0 %v454
    %601 = vmatpush1.msra.mxu0 %v453
    %602 = vmatprep.subr.mxu0 %v457
    %603 = vmatpush1.msra.mxu0 %v456
    %604 = vmatprep.subr.mxu0 %v460
    %605 = vmatpush1.msra.mxu0 %v459
    %606 = vmatprep.subr.mxu0 %v463
    %607 = vmatpush1.msra.mxu0 %v462
    %608 = vmatprep.subr.mxu0 %v466
    %609 = vmatpush1.msra.mxu0 %v465
    %610 = vmatprep.subr.mxu0 %v469
    %611 = vmatpush1.msra.mxu0 %v468
    %612 = vmatprep.subr.mxu0 %v472
    %613 = vmatpush1.msra.mxu0 %v471
    %614 = vmatprep.subr.mxu0 %v475
    %615 = vmatpush1.msra.mxu0 %v474
    %616 = vmatprep.subr.mxu0 %v478
    %617 = vmatpush1.msra.mxu0 %v477
    %618 = vmatprep.mubr.f32.mxu0 %v381
    %619 = vmatmul.mubr.f32.gmra.mrb[0].mxu0 %v380
    %v620 = vpop.f32.mrb[0].mxu0
    %v621 = vadd.f32 %v539, %v620
    %v622 = vpop.f32.mrb[0].mxu0
    %v623 = vadd.f32 %v543, %v622
    %624 = vdwg.mxu0
    %625 = vmatprep.subr.mxu0 %v481
    %626 = vmatpush1.msra.mxu0 %v480
    %627 = vmatprep.subr.mxu0 %v484
    %628 = vmatpush1.msra.mxu0 %v483
    %629 = vmatprep.subr.mxu0 %v487
    %630 = vmatpush1.msra.mxu0 %v486
    %631 = vmatprep.subr.mxu0 %v490
    %632 = vmatpush1.msra.mxu0 %v489
    %633 = vmatprep.subr.mxu0 %v493
    %634 = vmatpush1.msra.mxu0 %v492
    %635 = vmatprep.subr.mxu0 %v496
    %636 = vmatpush1.msra.mxu0 %v495
    %637 = vmatprep.subr.mxu0 %v499
    %638 = vmatpush1.msra.mxu0 %v498
    %639 = vmatprep.subr.mxu0 %v502
    %640 = vmatpush1.msra.mxu0 %v501
    %641 = vmatprep.subr.mxu0 %v505
    %642 = vmatpush1.msra.mxu0 %v504
    %643 = vmatprep.subr.mxu0 %v508
    %644 = vmatpush1.msra.mxu0 %v507
    %645 = vmatprep.subr.mxu0 %v511
    %646 = vmatpush1.msra.mxu0 %v510
    %647 = vmatprep.subr.mxu0 %v514
    %648 = vmatpush1.msra.mxu0 %v513
    %649 = vmatprep.subr.mxu0 %v517
    %650 = vmatpush1.msra.mxu0 %v516
    %651 = vmatprep.subr.mxu0 %v520
    %652 = vmatpush1.msra.mxu0 %v519
    %653 = vmatprep.subr.mxu0 %v523
    %654 = vmatpush1.msra.mxu0 %v522
    %655 = vmatprep.subr.mxu0 %v526
    %656 = vmatpush1.msra.mxu0 %v525
    %657 = vmatprep.subr.mxu0 %v529
    %658 = vmatpush1.msra.mxu0 %v528
    %659 = vmatprep.subr.mxu0 %v532
    %660 = vmatpush1.msra.mxu0 %v531
    %661 = vmatprep.subr.mxu0 0.0
    %662 = vmatpush1.msra.mxu0 0.0
    %663 = vmatprep.subr.mxu0 0.0
    %664 = vmatpush1.msra.mxu0 0.0
    %665 = vmatprep.subr.mxu0 0.0
    %666 = vmatpush1.msra.mxu0 0.0
    %667 = vmatprep.subr.mxu0 0.0
    %668 = vmatpush1.msra.mxu0 0.0
    %669 = vmatprep.subr.mxu0 0.0
    %670 = vmatpush1.msra.mxu0 0.0
    %671 = vmatprep.subr.mxu0 0.0
    %672 = vmatpush1.msra.mxu0 0.0
    %673 = vmatprep.subr.mxu0 0.0
    %674 = vmatpush1.msra.mxu0 0.0
    %675 = vmatprep.subr.mxu0 0.0
    %676 = vmatpush1.msra.mxu0 0.0
    %677 = vmatprep.subr.mxu0 0.0
    %678 = vmatpush1.msra.mxu0 0.0
    %679 = vmatprep.subr.mxu0 0.0
    %680 = vmatpush1.msra.mxu0 0.0
    %681 = vmatprep.subr.mxu0 0.0
    %682 = vmatpush1.msra.mxu0 0.0
    %683 = vmatprep.subr.mxu0 0.0
    %684 = vmatpush1.msra.mxu0 0.0
    %685 = vmatprep.subr.mxu0 0.0
    %686 = vmatpush1.msra.mxu0 0.0
    %687 = vmatprep.subr.mxu0 0.0
    %688 = vmatpush1.msra.mxu0 0.0
    %689 = vmatprep.mubr.f32.mxu0 %v552
    %690 = vmatmul.mubr.f32.gmra.mrb[0].mxu0 %v382
    %v691 = vpop.f32.mrb[0].mxu0
    %v692 = vadd.f32 %v621, %v691
    %v693 = vpop.f32.mrb[0].mxu0
    %v694 = vadd.f32 %v623, %v693
    %695 = vdwg.mxu0
    %696 = vmatprep.subr.mxu0 0.0
    %697 = vmatpush1.msra.mxu0 %v386
    %698 = vmatprep.subr.mxu0 0.0
    %699 = vmatpush1.msra.mxu0 %v389
    %700 = vmatprep.subr.mxu0 0.0
    %701 = vmatpush1.msra.mxu0 %v392
    %702 = vmatprep.subr.mxu0 0.0
    %703 = vmatpush1.msra.mxu0 %v395
    %704 = vmatprep.subr.mxu0 0.0
    %705 = vmatpush1.msra.mxu0 %v398
    %706 = vmatprep.subr.mxu0 0.0
    %707 = vmatpush1.msra.mxu0 %v401
    %708 = vmatprep.subr.mxu0 0.0
    %709 = vmatpush1.msra.mxu0 %v404
    %710 = vmatprep.subr.mxu0 0.0
    %711 = vmatpush1.msra.mxu0 %v407
    %712 = vmatprep.subr.mxu0 0.0
    %713 = vmatpush1.msra.mxu0 %v410
    %714 = vmatprep.subr.mxu0 0.0
    %715 = vmatpush1.msra.mxu0 %v413
    %716 = vmatprep.subr.mxu0 0.0
    %717 = vmatpush1.msra.mxu0 %v416
    %718 = vmatprep.subr.mxu0 0.0
    %719 = vmatpush1.msra.mxu0 %v419
    %720 = vmatprep.subr.mxu0 0.0
    %721 = vmatpush1.msra.mxu0 %v422
    %722 = vmatprep.subr.mxu0 0.0
    %723 = vmatpush1.msra.mxu0 %v425
    %724 = vmatprep.subr.mxu0 0.0
    %725 = vmatpush1.msra.mxu0 %v428
    %726 = vmatprep.subr.mxu0 0.0
    %727 = vmatpush1.msra.mxu0 %v431
    %728 = vmatprep.subr.mxu0 0.0
    %729 = vmatpush1.msra.mxu0 %v434
    %730 = vmatprep.subr.mxu0 0.0
    %731 = vmatpush1.msra.mxu0 %v437
    %732 = vmatprep.subr.mxu0 0.0
    %733 = vmatpush1.msra.mxu0 %v440
    %734 = vmatprep.subr.mxu0 0.0
    %735 = vmatpush1.msra.mxu0 %v443
    %736 = vmatprep.subr.mxu0 0.0
    %737 = vmatpush1.msra.mxu0 %v446
    %738 = vmatprep.subr.mxu0 0.0
    %739 = vmatpush1.msra.mxu0 %v449
    %740 = vmatprep.subr.mxu0 0.0
    %741 = vmatpush1.msra.mxu0 %v452
    %742 = vmatprep.subr.mxu0 0.0
    %743 = vmatpush1.msra.mxu0 %v455
    %744 = vmatprep.subr.mxu0 0.0
    %745 = vmatpush1.msra.mxu0 %v458
    %746 = vmatprep.subr.mxu0 0.0
    %747 = vmatpush1.msra.mxu0 %v461
    %748 = vmatprep.subr.mxu0 0.0
    %749 = vmatpush1.msra.mxu0 %v464
    %750 = vmatprep.subr.mxu0 0.0
    %751 = vmatpush1.msra.mxu0 %v467
    %752 = vmatprep.subr.mxu0 0.0
    %753 = vmatpush1.msra.mxu0 %v470
    %754 = vmatprep.subr.mxu0 0.0
    %755 = vmatpush1.msra.mxu0 %v473
    %756 = vmatprep.subr.mxu0 0.0
    %757 = vmatpush1.msra.mxu0 %v476
    %758 = vmatprep.subr.mxu0 0.0
    %759 = vmatpush1.msra.mxu0 %v479
    %760 = vmatprep.mubr.f32.mxu0 %v381
    %761 = vmatmul.mubr.f32.gmra.mrb[0].mxu0 %v380
    %v762 = vpop.f32.mrb[0].mxu0
    %v763 = vadd.f32 %v547, %v762
    %v764 = vpop.f32.mrb[0].mxu0
    %765 = vdwg.mxu0
    %766 = vmatprep.subr.mxu0 0.0
    %767 = vmatpush1.msra.mxu0 %v482
    %768 = vmatprep.subr.mxu0 0.0
    %769 = vmatpush1.msra.mxu0 %v485
    %770 = vmatprep.subr.mxu0 0.0
    %771 = vmatpush1.msra.mxu0 %v488
    %772 = vmatprep.subr.mxu0 0.0
    %773 = vmatpush1.msra.mxu0 %v491
    %774 = vmatprep.subr.mxu0 0.0
    %775 = vmatpush1.msra.mxu0 %v494
    %776 = vmatprep.subr.mxu0 0.0
    %777 = vmatpush1.msra.mxu0 %v497
    %778 = vmatprep.subr.mxu0 0.0
    %779 = vmatpush1.msra.mxu0 %v500
    %780 = vmatprep.subr.mxu0 0.0
    %781 = vmatpush1.msra.mxu0 %v503
    %782 = vmatprep.subr.mxu0 0.0
    %783 = vmatpush1.msra.mxu0 %v506
    %784 = vmatprep.subr.mxu0 0.0
    %785 = vmatpush1.msra.mxu0 %v509
    %786 = vmatprep.subr.mxu0 0.0
    %787 = vmatpush1.msra.mxu0 %v512
    %788 = vmatprep.subr.mxu0 0.0
    %789 = vmatpush1.msra.mxu0 %v515
    %790 = vmatprep.subr.mxu0 0.0
    %791 = vmatpush1.msra.mxu0 %v518
    %792 = vmatprep.subr.mxu0 0.0
    %793 = vmatpush1.msra.mxu0 %v521
    %794 = vmatprep.subr.mxu0 0.0
    %795 = vmatpush1.msra.mxu0 %v524
    %796 = vmatprep.subr.mxu0 0.0
    %797 = vmatpush1.msra.mxu0 %v527
    %798 = vmatprep.subr.mxu0 0.0
    %799 = vmatpush1.msra.mxu0 %v530
    %800 = vmatprep.subr.mxu0 0.0
    %801 = vmatpush1.msra.mxu0 %v533
    %802 = vmatprep.subr.mxu0 0.0
    %803 = vmatpush1.msra.mxu0 0.0
    %804 = vmatprep.subr.mxu0 0.0
    %805 = vmatpush1.msra.mxu0 0.0
    %806 = vmatprep.subr.mxu0 0.0
    %807 = vmatpush1.msra.mxu0 0.0
    %808 = vmatprep.subr.mxu0 0.0
    %809 = vmatpush1.msra.mxu0 0.0
    %810 = vmatprep.subr.mxu0 0.0
    %811 = vmatpush1.msra.mxu0 0.0
    %812 = vmatprep.subr.mxu0 0.0
    %813 = vmatpush1.msra.mxu0 0.0
    %814 = vmatprep.subr.mxu0 0.0
    %815 = vmatpush1.msra.mxu0 0.0
    %816 = vmatprep.subr.mxu0 0.0
    %817 = vmatpush1.msra.mxu0 0.0
    %818 = vmatprep.subr.mxu0 0.0
    %819 = vmatpush1.msra.mxu0 0.0
    %820 = vmatprep.subr.mxu0 0.0
    %821 = vmatpush1.msra.mxu0 0.0
    %822 = vmatprep.subr.mxu0 0.0
    %823 = vmatpush1.msra.mxu0 0.0
    %824 = vmatprep.subr.mxu0 0.0
    %825 = vmatpush1.msra.mxu0 0.0
    %826 = vmatprep.subr.mxu0 0.0
    %827 = vmatpush1.msra.mxu0 0.0
    %828 = vmatprep.subr.mxu0 0.0
    %829 = vmatpush1.msra.mxu0 0.0
    %830 = vmatprep.mubr.f32.mxu0 %v552
    %831 = vmatmul.mubr.f32.gmra.mrb[0].mxu0 %v382
    %v832 = vpop.f32.mrb[0].mxu0
    %v833 = vadd.f32 %v763, %v832
    %v834 = vpop.f32.mrb[0].mxu0
    %835 = vdwg.mxu0
    %v836 = vmax.f32 %v692, 0.0
    %v837 = vmax.f32 %v694, 0.0
    %v838 = vmax.f32 %v833, 0.0
    %v839 = vld [vmem:[%s7] sm:$0xff]
    %v840 = vld [vmem:[%s7 + $0x8] sm:$0xff]
    %v841 = vld [vmem:[%s7 + $0x10] sm:$0xff]
    %v842 = vld [vmem:[%s7 + $0x18] sm:$0xff]
    %v843 = vld [vmem:[%s7 + $0x20] sm:$0xff]
    %v844 = vld [vmem:[%s7 + $0x28] sm:$0xff]
    %v845 = vld [vmem:[%s7 + $0x30] sm:$0xff]
    %v846 = vld [vmem:[%s7 + $0x38] sm:$0xff]
    %v847 = vld [vmem:[%s7 + $0x40] sm:$0xff]
    %v848 = vld [vmem:[%s7 + $0x48] sm:$0xff]
    %v849 = vld [vmem:[%s7 + $0x50] sm:$0xff]
    %v850 = vld [vmem:[%s7 + $0x58] sm:$0xff]
    %v851 = vld [vmem:[%s7 + $0x60] sm:$0xff]
    %v852 = vld [vmem:[%s7 + $0x68] sm:$0xff]
    %v853 = vld [vmem:[%s7 + $0x70] sm:$0xff]
    %v854 = vld [vmem:[%s7 + $0x78] sm:$0xff]
    %v855 = vld [vmem:[%s7 + $0x80] sm:$0xff]
    %v856 = vld [vmem:[%s7 + $0x88] sm:$0xff]
    %v857 = vld [vmem:[%s7 + $0x90] sm:$0xff]
    %v858 = vld [vmem:[%s7 + $0x98] sm:$0xff]
    %v859 = vld [vmem:[%s7 + $0xa0] sm:$0xff]
    %v860 = vld [vmem:[%s7 + $0xa8] sm:$0xff]
    %v861 = vld [vmem:[%s7 + $0xb0] sm:$0xff]
    %v862 = vld [vmem:[%s7 + $0xb8] sm:$0xff]
    %v863 = vld [vmem:[%s7 + $0xc0] sm:$0xff]
    %v864 = vld [vmem:[%s7 + $0xc8] sm:$0xff]
    %v865 = vld [vmem:[%s7 + $0xd0] sm:$0xff]
    %v866 = vld [vmem:[%s7 + $0xd8] sm:$0xff]
    %v867 = vld [vmem:[%s7 + $0xe0] sm:$0xff]
    %v868 = vld [vmem:[%s7 + $0xe8] sm:$0xff]
    %v869 = vld [vmem:[%s7 + $0xf0] sm:$0xff]
    %v870 = vld [vmem:[%s7 + $0xf8] sm:$0xff]
    %v871 = vld [vmem:[%s7 + $0x100] sm:$0xff]
    %v872 = vld [vmem:[%s7 + $0x108] sm:$0xff]
    %v873 = vld [vmem:[%s7 + $0x110] sm:$0xff]
    %v874 = vld [vmem:[%s7 + $0x118] sm:$0xff]
    %v875 = vld [vmem:[%s7 + $0x120] sm:$0xff]
    %v876 = vld [vmem:[%s7 + $0x128] sm:$0xf]
    %v877 = vld [vmem:[#allocation2] sm:$0x1]
    %v879 = vlaneseq
    %v880 = vshrl.u32 %v879, 7
    %v881 = vsub.s32 0, %v880
    %v882 = vrot.slane %v877, %v881
    %vm884 = vcmask 359424
    %v886 = vsel %vm884, %v838, 0
    %vm888 = vcmask 1043456
    %v890 = vsel %vm888, %v876, 0
    %892 = vmatprep.subr.mxu0 0.0
    %893 = vmatpush1.msra.mxu0 %v839
    %894 = vmatprep.subr.mxu0 0.0
    %895 = vmatpush1.msra.mxu0 %v840
    %896 = vmatprep.subr.mxu0 0.0
    %897 = vmatpush1.msra.mxu0 %v841
    %898 = vmatprep.subr.mxu0 0.0
    %899 = vmatpush1.msra.mxu0 %v842
    %900 = vmatprep.subr.mxu0 0.0
    %901 = vmatpush1.msra.mxu0 %v843
    %902 = vmatprep.subr.mxu0 0.0
    %903 = vmatpush1.msra.mxu0 %v844
    %904 = vmatprep.subr.mxu0 0.0
    %905 = vmatpush1.msra.mxu0 %v845
    %906 = vmatprep.subr.mxu0 0.0
    %907 = vmatpush1.msra.mxu0 %v846
    %908 = vmatprep.subr.mxu0 0.0
    %909 = vmatpush1.msra.mxu0 %v847
    %910 = vmatprep.subr.mxu0 0.0
    %911 = vmatpush1.msra.mxu0 %v848
    %912 = vmatprep.subr.mxu0 0.0
    %913 = vmatpush1.msra.mxu0 %v849
    %914 = vmatprep.subr.mxu0 0.0
    %915 = vmatpush1.msra.mxu0 %v850
    %916 = vmatprep.subr.mxu0 0.0
    %917 = vmatpush1.msra.mxu0 %v851
    %918 = vmatprep.subr.mxu0 0.0
    %919 = vmatpush1.msra.mxu0 %v852
    %920 = vmatprep.subr.mxu0 0.0
    %921 = vmatpush1.msra.mxu0 %v853
    %922 = vmatprep.subr.mxu0 0.0
    %923 = vmatpush1.msra.mxu0 %v854
    %924 = vmatprep.subr.mxu0 0.0
    %925 = vmatpush1.msra.mxu0 %v855
    %926 = vmatprep.subr.mxu0 0.0
    %927 = vmatpush1.msra.mxu0 %v856
    %928 = vmatprep.subr.mxu0 0.0
    %929 = vmatpush1.msra.mxu0 %v857
    %930 = vmatprep.subr.mxu0 0.0
    %931 = vmatpush1.msra.mxu0 %v858
    %932 = vmatprep.subr.mxu0 0.0
    %933 = vmatpush1.msra.mxu0 %v859
    %934 = vmatprep.subr.mxu0 0.0
    %935 = vmatpush1.msra.mxu0 %v860
    %936 = vmatprep.subr.mxu0 0.0
    %937 = vmatpush1.msra.mxu0 %v861
    %938 = vmatprep.subr.mxu0 0.0
    %939 = vmatpush1.msra.mxu0 %v862
    %940 = vmatprep.subr.mxu0 0.0
    %941 = vmatpush1.msra.mxu0 %v863
    %942 = vmatprep.subr.mxu0 0.0
    %943 = vmatpush1.msra.mxu0 %v864
    %944 = vmatprep.subr.mxu0 0.0
    %945 = vmatpush1.msra.mxu0 %v865
    %946 = vmatprep.subr.mxu0 0.0
    %947 = vmatpush1.msra.mxu0 %v866
    %948 = vmatprep.subr.mxu0 0.0
    %949 = vmatpush1.msra.mxu0 %v867
    %950 = vmatprep.subr.mxu0 0.0
    %951 = vmatpush1.msra.mxu0 %v868
    %952 = vmatprep.subr.mxu0 0.0
    %953 = vmatpush1.msra.mxu0 %v869
    %954 = vmatprep.subr.mxu0 0.0
    %955 = vmatpush1.msra.mxu0 %v870
    %956 = vmatprep.mubr.f32.mxu0 %v837
    %957 = vmatmul.mubr.f32.gmra.mrb[0].mxu0 %v836
    %v958 = vpop.f32.mrb[0].mxu0
    %v959 = vadd.f32 %v882, %v958
    %v960 = vpop.f32.mrb[0].mxu0
    %961 = vdwg.mxu0
    %962 = vmatprep.subr.mxu0 0.0
    %963 = vmatpush1.msra.mxu0 %v871
    %964 = vmatprep.subr.mxu0 0.0
    %965 = vmatpush1.msra.mxu0 %v872
    %966 = vmatprep.subr.mxu0 0.0
    %967 = vmatpush1.msra.mxu0 %v873
    %968 = vmatprep.subr.mxu0 0.0
    %969 = vmatpush1.msra.mxu0 %v874
    %970 = vmatprep.subr.mxu0 0.0
    %971 = vmatpush1.msra.mxu0 %v875
    %972 = vmatprep.subr.mxu0 0.0
    %973 = vmatpush1.msra.mxu0 %v890
    %974 = vmatprep.subr.mxu0 0.0
    %975 = vmatpush1.msra.mxu0 0.0
    %976 = vmatprep.subr.mxu0 0.0
    %977 = vmatpush1.msra.mxu0 0.0
    %978 = vmatprep.subr.mxu0 0.0
    %979 = vmatpush1.msra.mxu0 0.0
    %980 = vmatprep.subr.mxu0 0.0
    %981 = vmatpush1.msra.mxu0 0.0
    %982 = vmatprep.subr.mxu0 0.0
    %983 = vmatpush1.msra.mxu0 0.0
    %984 = vmatprep.subr.mxu0 0.0
    %985 = vmatpush1.msra.mxu0 0.0
    %986 = vmatprep.subr.mxu0 0.0
    %987 = vmatpush1.msra.mxu0 0.0
    %988 = vmatprep.subr.mxu0 0.0
    %989 = vmatpush1.msra.mxu0 0.0
    %990 = vmatprep.subr.mxu0 0.0
    %991 = vmatpush1.msra.mxu0 0.0
    %992 = vmatprep.subr.mxu0 0.0
    %993 = vmatpush1.msra.mxu0 0.0
    %994 = vmatprep.subr.mxu0 0.0
    %995 = vmatpush1.msra.mxu0 0.0
    %996 = vmatprep.subr.mxu0 0.0
    %997 = vmatpush1.msra.mxu0 0.0
    %998 = vmatprep.subr.mxu0 0.0
    %999 = vmatpush1.msra.mxu0 0.0
    %1000 = vmatprep.subr.mxu0 0.0
    %1001 = vmatpush1.msra.mxu0 0.0
    %1002 = vmatprep.subr.mxu0 0.0
    %1003 = vmatpush1.msra.mxu0 0.0
    %1004 = vmatprep.subr.mxu0 0.0
    %1005 = vmatpush1.msra.mxu0 0.0
    %1006 = vmatprep.subr.mxu0 0.0
    %1007 = vmatpush1.msra.mxu0 0.0
    %1008 = vmatprep.subr.mxu0 0.0
    %1009 = vmatpush1.msra.mxu0 0.0
    %1010 = vmatprep.subr.mxu0 0.0
    %1011 = vmatpush1.msra.mxu0 0.0
    %1012 = vmatprep.subr.mxu0 0.0
    %1013 = vmatpush1.msra.mxu0 0.0
    %1014 = vmatprep.subr.mxu0 0.0
    %1015 = vmatpush1.msra.mxu0 0.0
    %1016 = vmatprep.subr.mxu0 0.0
    %1017 = vmatpush1.msra.mxu0 0.0
    %1018 = vmatprep.subr.mxu0 0.0
    %1019 = vmatpush1.msra.mxu0 0.0
    %1020 = vmatprep.subr.mxu0 0.0
    %1021 = vmatpush1.msra.mxu0 0.0
    %1022 = vmatprep.subr.mxu0 0.0
    %1023 = vmatpush1.msra.mxu0 0.0
    %1024 = vmatprep.subr.mxu0 0.0
    %1025 = vmatpush1.msra.mxu0 0.0
    %1026 = vmatprep.mubr.f32.mxu0 0.0
    %1027 = vmatmul.mubr.f32.gmra.mrb[0].mxu0 %v886
    %v1028 = vpop.f32.mrb[0].mxu0
    %v1029 = vadd.f32 %v959, %v1028
    %v1030 = vpop.f32.mrb[0].mxu0
    %1031 = vdwg.mxu0
    %vm1032 = vcmask 7168
    %1033 = vst.msk [vmem:[%s9] sm:$0xff] %vm1032, %v1029
    // Predicated region
    $region42: #{critic_forward.1} parent=1 // pred_check
      _
    $region43: #{critic_forward.1} parent=1 // pred_check_branch
      %1035 = sbr.rel (0) target = $region45
    $region44: #{critic_forward.1} parent=1 // pred_region
      _
    $region45: #{critic_forward.1} parent=1 // pred_fallthru
      _
    // Predicated region
    $region46: #{critic_forward.1} parent=1 // pred_check
      _
    $region47: #{critic_forward.1} parent=1 // pred_check_branch
      %1037 = sbr.rel (0) target = $region49
    $region48: #{critic_forward.1} parent=1 // pred_region
      _
    $region49: #{critic_forward.1} parent=1 // pred_fallthru
      _
    %1038 = vsyncpa [#allocation4], 1

</llo_original>
